<compile_context>
chip_gen: v6e
topology: v6e:2x2x1
jax: 0.10.0
libtpu: 0.0.40
codegen_flags: <defaults>
</compile_context>

<pallas_src>
import jax
import jax.numpy as jnp
from jax import lax
from jax.experimental import pallas as pl
from jax.experimental.pallas import tpu as pltpu


def _gate_kernel(x_ref, w_ref, o_ref):
    # logits^T: [E, TB] = contract W[E, D] with x[TB, D] over D (MXU matmul).
    logits = lax.dot_general(
        w_ref[...],
        x_ref[...],
        dimension_numbers=(((1,), (1,)), ((), ())),
        preferred_element_type=jnp.float32,
    )
    # Numerically stable softmax over the expert axis (axis 0 here == PyTorch
    # dim=1): an 8-sublane reduce per token column. Exact division so each
    # token's probabilities sum to 1 to f32 rounding.
    m = jnp.max(logits, axis=0, keepdims=True)
    e = jnp.exp(logits - m)
    s = jnp.sum(e, axis=0, keepdims=True)
    o_ref[...] = (e / s).astype(o_ref.dtype)


def gate_forward(x, w, block_b=16384):
    """Gate forward: softmax(x @ w.T, axis=-1).

    x: [B, D]  (batch, input_size)
    w: [E, D]  (nn.Linear(input_size, expert_num, bias=False).weight)
    returns [B, E] float32 with rows summing to 1.
    """
    B, D = x.shape
    E, D2 = w.shape
    assert D == D2, "weight inner dim must match input_size"

    if B <= block_b:
        # Single grid step with full-extent blocks (legal for any B).
        tb = B
        grid_b = 1
    else:
        # Lane-dense output stores require the batch tile (the output's last
        # dim) to be a multiple of 128. The last (partial) block is masked.
        tb = max(128, (block_b // 128) * 128)
        grid_b = pl.cdiv(B, tb)

    out_t = pl.pallas_call(
        _gate_kernel,
        out_shape=jax.ShapeDtypeStruct((E, B), jnp.float32),
        grid_spec=pltpu.PrefetchScalarGridSpec(
            num_scalar_prefetch=0,
            grid=(grid_b,),
            in_specs=[
                # x: tiled over batch; D kept as a full-extent block entry.
                pl.BlockSpec((tb, D), lambda i: (i, 0)),
                # W: single full block, constant index_map -> resident in VMEM.
                pl.BlockSpec((E, D), lambda i: (0, 0)),
            ],
            # Transposed, lane-dense output: experts on sublanes, tokens on lanes.
            out_specs=pl.BlockSpec((E, tb), lambda i: (0, i)),
        ),
        compiler_params=pltpu.CompilerParams(
            # Batch tiles are independent -> megacore sharding on v7x when the
            # grid has >= 2 steps; no-op on single-TC v5e/v6e.
            dimension_semantics=("parallel",),
            vmem_limit_bytes=48 * 1024 * 1024,
        ),
        cost_estimate=pl.CostEstimate(
            flops=2 * B * D * E,
            transcendentals=B * E,
            bytes_accessed=(B * D + E * D + B * E) * 4,
        ),
    )(x, w)

    # [E, B] -> [B, E]; tiny relative to the x stream.
    return out_t.T


def _ref(x, w):
    return jax.nn.softmax(x @ w.T, axis=-1)


if __name__ == "__main__":
    # Module hyperparameters (small, consistent with the forward pass).
    batch = 8
    input_size = 32
    expert_num = 8

    key = jax.random.PRNGKey(0)
    kx, kw, kx2 = jax.random.split(key, 3)

    # Deterministic synthetic inputs / parameters (no checkpoint load).
    x = jax.random.normal(kx, (batch, input_size), dtype=jnp.float32)
    bound = 1.0 / (input_size ** 0.5)
    w = jax.random.uniform(
        kw, (expert_num, input_size), dtype=jnp.float32, minval=-bound, maxval=bound
    )

    # --- small case: single grid step, full-extent blocks ---
    y = gate_forward(x, w)
    jax.block_until_ready(y)
    r = _ref(x, w)
    assert y.shape == (batch, expert_num)
    assert jnp.allclose(y, r, atol=2e-3, rtol=2e-3)
    assert jnp.allclose(jnp.sum(y, axis=-1), jnp.ones((batch,)), atol=1e-3)

    # --- multi-tile case: batch tiling + ragged (masked) boundary block ---
    batch2 = 300  # not a multiple of the 128-row tile -> grid=3, last block masked
    x2 = jax.random.normal(kx2, (batch2, input_size), dtype=jnp.float32)
    y2 = gate_forward(x2, w, block_b=128)
    jax.block_until_ready(y2)
    r2 = _ref(x2, w)
    assert y2.shape == (batch2, expert_num)
    assert jnp.allclose(y2, r2, atol=2e-3, rtol=2e-3)
    assert jnp.allclose(jnp.sum(y2, axis=-1), jnp.ones((batch2,)), atol=1e-3)

    print("KERNEL_OK")
</pallas_src>

<mosaic_0001>
module attributes {stable_mosaic.version = 11 : i64} {
  func.func @_gate_kernel(%arg0: i32, %arg1: memref<8x32xf32, #tpu.memory_space<vmem>>, %arg2: memref<8x32xf32, #tpu.memory_space<vmem>>, %arg3: memref<8x8xf32, #tpu.memory_space<vmem>>) attributes {dimension_semantics = [#tpu.dimension_semantics<parallel>], iteration_bounds = array<i64: 1>, scalar_prefetch = 0 : i64, scratch_operands = 0 : i64, tpu.core_type = #tpu.core_type<tc>, window_params = [{transform_indices = @transform_0, window_bounds = array<i64: 8, 32>}, {pipeline_mode = #tpu.pipeline_mode<synchronous>, transform_indices = @transform_1, window_bounds = array<i64: 8, 32>}, {transform_indices = @transform_2, window_bounds = array<i64: 8, 8>}]} {
    %c0 = arith.constant 0 : index
    %c0_0 = arith.constant 0 : index
    %0 = vector.load %arg2[%c0, %c0_0] : memref<8x32xf32, #tpu.memory_space<vmem>>, vector<8x32xf32>
    %c0_1 = arith.constant 0 : index
    %c0_2 = arith.constant 0 : index
    %1 = vector.load %arg1[%c0_1, %c0_2] : memref<8x32xf32, #tpu.memory_space<vmem>>, vector<8x32xf32>
    %cst = arith.constant dense<0.000000e+00> : vector<8x8xf32>
    %2 = tpu.matmul %0, %1, %cst {dimension_numbers = #tpu.dot_dimension_numbers<[1], [1], [0], [0], [0, 0, 1, 0], [], []>} : vector<8x32xf32>, vector<8x32xf32>, vector<8x8xf32> -> vector<8x8xf32>
    %cst_3 = arith.constant dense<0xFF800000> : vector<8xf32>
    %3 = vector.multi_reduction <maximumf>, %2, %cst_3 [0] : vector<8x8xf32> to vector<8xf32>
    %4 = vector.shape_cast %3 : vector<8xf32> to vector<1x8xf32>
    %5 = vector.broadcast %4 : vector<1x8xf32> to vector<8x8xf32>
    %6 = arith.subf %2, %5 : vector<8x8xf32>
    %7 = math.exp %6 : vector<8x8xf32>
    %cst_4 = arith.constant dense<0.000000e+00> : vector<8xf32>
    %8 = vector.multi_reduction <add>, %7, %cst_4 [0] : vector<8x8xf32> to vector<8xf32>
    %9 = vector.shape_cast %8 : vector<8xf32> to vector<1x8xf32>
    %10 = vector.broadcast %9 : vector<1x8xf32> to vector<8x8xf32>
    %11 = arith.divf %7, %10 : vector<8x8xf32>
    %c0_5 = arith.constant 0 : index
    %c0_6 = arith.constant 0 : index
    %12 = vector.load %arg3[%c0_5, %c0_6] : memref<8x8xf32, #tpu.memory_space<vmem>>, vector<8x8xf32>
    tpu.vector_store %arg3[%c0_5, %c0_6], %11 {strides = array<i32>} : memref<8x8xf32, #tpu.memory_space<vmem>>, vector<8x8xf32>,
    return
  }
  func.func @transform_0(%arg0: i32) -> (i32, i32) {
    %c0_i32 = arith.constant 0 : i32
    %c0_i32_0 = arith.constant 0 : i32
    return %arg0, %c0_i32 : i32, i32
  }
  func.func @transform_1(%arg0: i32) -> (i32, i32) {
    %c0_i32 = arith.constant 0 : i32
    %c0_i32_0 = arith.constant 0 : i32
    %c0_i32_1 = arith.constant 0 : i32
    return %c0_i32, %c0_i32_0 : i32, i32
  }
  func.func @transform_2(%arg0: i32) -> (i32, i32) {
    %c0_i32 = arith.constant 0 : i32
    %c0_i32_0 = arith.constant 0 : i32
    return %c0_i32, %arg0 : i32, i32
  }
}

</mosaic_0001>

<llo_original>
// kernel: tpu_custom_call.1
$region0: #{tpu_custom_call.1}
  #allocation0 [shape = 'u32[]', space=smem, size = 0x4, offset = 0x4, fixed_abs, tag = 'smem constant byte address 0x4 - core index']
  #allocation1 [shape = 'u32[144,128]{1,0:T(1,128)}', space=vmem, size = 0x12000, scoped, tag = 'internal scratch']
  %s0 = inlined_call_operand.hbm [shape: f32[8,32], index: 0, kind: input, shape index: {}]
  %s1 = inlined_call_operand.hbm [shape: f32[8,32], index: 1, kind: input, shape index: {}]
  %s2 = inlined_call_operand.hbm [shape: f32[8,8], index: 2, kind: output, shape index: {}]
  %s3 = sld [smem:[#allocation0]]
  $region26: #{tpu_custom_call.1} parent=0
    _
  %s5 = ssub.s32 1, %s3
  %s6 = scalar_select 0, %s5, %s3
  $region1: #{tpu_custom_call.1} parent=0
    #allocation2 [shape = 'u8[4096]{0}', space=vmem, size = 0x1000, scoped, tag = 'input window, operand 0, single buffered']
    #allocation3 [shape = 's32[1]{0}', space=sflag, size = 0x4, scoped, tag = 'scoped memory for tpu_custom_call.1']
    #allocation4 [shape = 's32[1]{0}', space=sflag, size = 0x4, scoped, tag = 'scoped memory for tpu_custom_call.1']
    #allocation5 [shape = 'u8[4096]{0}', space=vmem, size = 0x1000, scoped, tag = 'input window, operand 1, single buffered']
    #allocation6 [shape = 's32[1]{0}', space=sflag, size = 0x4, scoped, tag = 'scoped memory for tpu_custom_call.1']
    #allocation7 [shape = 'u8[4096]{0}', space=vmem, size = 0x1000, scoped, tag = 'output window, operand 0, single buffered']
    %7 = vsyncpa [#allocation3], 0
    %8 = vsyncpa [#allocation6], 0
    %9 = vsyncpa [#allocation4], 0
    // Predicated region
    $region2: #{tpu_custom_call.1} parent=1 // pred_check
      _
    $region3: #{tpu_custom_call.1} parent=1 // pred_check_branch
      %11 = sbr.rel (0) target = $region5
    $region4: #{tpu_custom_call.1} parent=1 // pred_region
      %s13 = ssub.s32 128, 128
      %14 = vsyncadd [#allocation3], %s13
      %s16 = sshll.u32 [#allocation2], 4
      %s17 = int_to_ptr.vmem [resolvable:$true] %s16
      %19 = dma.hbm_to_vmem [thread:$0]  %s0, 128, %s17, [#allocation3]
    $region5: #{tpu_custom_call.1} parent=1 // pred_fallthru
      _
    // Predicated region
    $region6: #{tpu_custom_call.1} parent=1 // pred_check
      _
    $region7: #{tpu_custom_call.1} parent=1 // pred_check_branch
      %21 = sbr.rel (0) target = $region9
    $region8: #{tpu_custom_call.1} parent=1 // pred_region
      %s23 = ssub.s32 128, 128
      %24 = vsyncadd [#allocation6], %s23
      %s26 = sshll.u32 [#allocation5], 4
      %s27 = int_to_ptr.vmem [resolvable:$true] %s26
      %29 = dma.hbm_to_vmem [thread:$0]  %s1, 128, %s27, [#allocation6]
    $region9: #{tpu_custom_call.1} parent=1 // pred_fallthru
      _
    // Predicated region
    $region10: #{tpu_custom_call.1} parent=1 // pred_check
      _
    $region11: #{tpu_custom_call.1} parent=1 // pred_check_branch
      %31 = sbr.rel (0) target = $region13
    $region12: #{tpu_custom_call.1} parent=1 // pred_region
      %32 = dma.done [#allocation3], 128
    $region13: #{tpu_custom_call.1} parent=1 // pred_fallthru
      _
    // Predicated region
    $region14: #{tpu_custom_call.1} parent=1 // pred_check
      _
    $region15: #{tpu_custom_call.1} parent=1 // pred_check_branch
      %34 = sbr.rel (0) target = $region17
    $region16: #{tpu_custom_call.1} parent=1 // pred_region
      %35 = dma.done [#allocation6], 128
    $region17: #{tpu_custom_call.1} parent=1 // pred_fallthru
      _
    %v36 = vld [vmem:[#allocation5] sm:$0xff]
    %v37 = vld [vmem:[#allocation2] sm:$0xff]
    %vm38 = vcmask 261120
    %v40 = vsel %vm38, %v36, 0
    %v43 = vsel %vm38, %v37, 0
    %45 = vmatprep.subr.mxu0 0.0
    %46 = vmatpush1.xpose.msra.mxu0 0.0
    %47 = vmatprep.subr.mxu0 0.0
    %48 = vmatpush1.xpose.msra.mxu0 0.0
    %49 = vmatprep.subr.mxu0 0.0
    %50 = vmatpush1.xpose.msra.mxu0 0.0
    %51 = vmatprep.subr.mxu0 0.0
    %52 = vmatpush1.xpose.msra.mxu0 0.0
    %53 = vmatprep.subr.mxu0 0.0
    %54 = vmatpush1.xpose.msra.mxu0 0.0
    %55 = vmatprep.subr.mxu0 0.0
    %56 = vmatpush1.xpose.msra.mxu0 0.0
    %57 = vmatprep.subr.mxu0 0.0
    %58 = vmatpush1.xpose.msra.mxu0 0.0
    %59 = vmatprep.subr.mxu0 0.0
    %60 = vmatpush1.xpose.msra.mxu0 0.0
    %61 = vmatprep.subr.mxu0 0.0
    %62 = vmatpush1.xpose.msra.mxu0 0.0
    %63 = vmatprep.subr.mxu0 0.0
    %64 = vmatpush1.xpose.msra.mxu0 0.0
    %65 = vmatprep.subr.mxu0 0.0
    %66 = vmatpush1.xpose.msra.mxu0 0.0
    %67 = vmatprep.subr.mxu0 0.0
    %68 = vmatpush1.xpose.msra.mxu0 0.0
    %69 = vmatprep.subr.mxu0 0.0
    %70 = vmatpush1.xpose.msra.mxu0 0.0
    %71 = vmatprep.subr.mxu0 0.0
    %72 = vmatpush1.xpose.msra.mxu0 0.0
    %73 = vmatprep.subr.mxu0 0.0
    %74 = vmatpush1.xpose.msra.mxu0 0.0
    %75 = vmatprep.subr.mxu0 0.0
    %76 = vmatpush1.xpose.msra.mxu0 %v43
    %77 = vmatprep.subr.mxu0 0.0
    %78 = vmatpush2.xpose.msra.mxu0 0.0
    %79 = vmatprep.subr.mxu0 0.0
    %80 = vmatpush2.xpose.msra.mxu0 0.0
    %81 = vmatprep.subr.mxu0 0.0
    %82 = vmatpush2.xpose.msra.mxu0 0.0
    %83 = vmatprep.subr.mxu0 0.0
    %84 = vmatpush2.xpose.msra.mxu0 0.0
    %85 = vmatprep.subr.mxu0 0.0
    %86 = vmatpush2.xpose.msra.mxu0 0.0
    %87 = vmatprep.subr.mxu0 0.0
    %88 = vmatpush2.xpose.msra.mxu0 0.0
    %89 = vmatprep.subr.mxu0 0.0
    %90 = vmatpush2.xpose.msra.mxu0 0.0
    %91 = vmatprep.subr.mxu0 0.0
    %92 = vmatpush2.xpose.msra.mxu0 0.0
    %93 = vmatprep.subr.mxu0 0.0
    %94 = vmatpush2.xpose.msra.mxu0 0.0
    %95 = vmatprep.subr.mxu0 0.0
    %96 = vmatpush2.xpose.msra.mxu0 0.0
    %97 = vmatprep.subr.mxu0 0.0
    %98 = vmatpush2.xpose.msra.mxu0 0.0
    %99 = vmatprep.subr.mxu0 0.0
    %100 = vmatpush2.xpose.msra.mxu0 0.0
    %101 = vmatprep.subr.mxu0 0.0
    %102 = vmatpush2.xpose.msra.mxu0 0.0
    %103 = vmatprep.subr.mxu0 0.0
    %104 = vmatpush2.xpose.msra.mxu0 0.0
    %105 = vmatprep.subr.mxu0 0.0
    %106 = vmatpush2.xpose.msra.mxu0 0.0
    %107 = vmatprep.subr.mxu0 0.0
    %108 = vmatpush2.xpose.msra.mxu0 0.0
    %109 = vmatprep.mubr.f32.mxu0 0.0
    %110 = vmatmul.mubr.f32.gmra.mxu0 %v40
    %v111 = vpop.f32.mrf.mxu0
    %v112 = vadd.f32 0.0, %v111
    %v113 = vpop.f32.mrf.mxu0
    %114 = vdwg.mxu0
    %vm115 = vcmask 64512
    %v116 = vsel %vm115, %v112, -inf
    %v117 = vrot.slane %v116, 4
    %v118 = vmax.f32 %v116, %v117
    %v119 = vrot.slane %v118, 2
    %v120 = vmax.f32 %v118, %v119
    %v121 = vrot.slane %v120, 1
    %v122 = vmax.f32 %v120, %v121
    %v123 = vsub.f32 %v112, %v122
    %v124 = vmul.f32 %v123, 1.442695
    %v125 = vpow.pop %v124
    %v126 = vsel %vm115, %v125, 0.0
    %v127 = vrot.slane %v126, 4
    %v128 = vadd.f32 %v126, %v127
    %v129 = vrot.slane %v128, 2
    %v130 = vadd.f32 %v128, %v129
    %v131 = vrot.slane %v130, 1
    %v132 = vadd.f32 %v130, %v131
    %v133 = vrcp.pop %v132
    %v134 = vmul.f32 %v125, %v133
    %135 = vst.msk [vmem:[#allocation7] sm:$0xff] %vm115, %v134
    // Predicated region
    $region18: #{tpu_custom_call.1} parent=1 // pred_check
      _
    $region19: #{tpu_custom_call.1} parent=1 // pred_check_branch
      %137 = sbr.rel (0) target = $region21
    $region20: #{tpu_custom_call.1} parent=1 // pred_region
      %s139 = ssub.s32 128, 128
      %140 = vsyncadd [#allocation4], %s139
      %s142 = sshll.u32 [#allocation7], 4
      %s143 = int_to_ptr.vmem [resolvable:$true] %s142
      %145 = dma.vmem_to_hbm [thread:$0]  %s143, 128, %s2, [#allocation4]
    $region21: #{tpu_custom_call.1} parent=1 // pred_fallthru
      _
    // Predicated region
    $region22: #{tpu_custom_call.1} parent=1 // pred_check
      _
    $region23: #{tpu_custom_call.1} parent=1 // pred_check_branch
      %147 = sbr.rel (0) target = $region25
    $region24: #{tpu_custom_call.1} parent=1 // pred_region
      %148 = dma.done [#allocation4], 128
    $region25: #{tpu_custom_call.1} parent=1 // pred_fallthru
      _
    %149 = vsyncpa [#allocation3], 1
    %150 = vsyncpa [#allocation6], 1
    %151 = vsyncpa [#allocation4], 1

</llo_original>
